<compile_context>
chip_gen: v7x
topology: tpu7x:2x2x1
jax: 0.10.0
libtpu: 0.0.40
codegen_flags: <defaults>
</compile_context>

<pallas_src>
import jax
import jax.numpy as jnp
from jax.experimental import pallas as pl
from jax.experimental.pallas import tpu as pltpu

LANES = 128      # vreg lane width
SUBLANES = 8     # f32 vreg sublane count
HIDDEN = 10      # fc1 out / fc2 in features


def mlp_kernel(params_ref, x_ref, o_ref):
    # params_ref: SMEM (3*HIDDEN + 1,) f32 = [w1(10) | b1(10) | w2(10) | b2(1)]
    # x_ref / o_ref: VMEM (tile_rows, 128) f32, batch elements on sublane x lane.
    x = x_ref[...]
    acc = jnp.zeros(x.shape, jnp.float32)
    for j in range(HIDDEN):  # static unroll: 10 x (FMA + ReLU + FMA) on the VPU
        h = jnp.maximum(x * params_ref[j] + params_ref[HIDDEN + j], 0.0)
        acc = acc + h * params_ref[2 * HIDDEN + j]
    o_ref[...] = (acc + params_ref[3 * HIDDEN]).astype(o_ref.dtype)


def simple_model_forward(x, w1, b1, w2, b2, *, tile_rows=1024):
    """x: (B, 1) f32 -> (B, 1) f32.
    Weights stored transposed vs. PyTorch: w1 (1,10), b1 (10,), w2 (10,1), b2 (1,)."""
    B = x.shape[0]

    # Pack all 31 scalars into one SMEM-resident vector (no per-param DMAs).
    params = jnp.concatenate(
        [w1.reshape(-1), b1.reshape(-1), w2.reshape(-1), b2.reshape(-1)]
    ).astype(jnp.float32)

    # Lane-dense re-layout: batch -> (rows, 128) slab; rows is a multiple of the
    # tile height, which itself is a multiple of 8 sublanes.
    rows = pl.cdiv(B, LANES)
    rows = ((rows + SUBLANES - 1) // SUBLANES) * SUBLANES
    tr = min(tile_rows, rows)                 # tile height (multiple of 8)
    rows = ((rows + tr - 1) // tr) * tr       # whole number of tiles
    total = rows * LANES

    xf = jnp.pad(x.reshape(-1).astype(jnp.float32), (0, total - B))
    x2 = xf.reshape(rows, LANES)

    # VMEM budget: (in + out) * 2 double-buffers * tr*128*4B; tr=1024 -> ~2 MiB,
    # comfortably under v7x's 32 MiB default-scoped VMEM.
    out2 = pl.pallas_call(
        mlp_kernel,
        out_shape=jax.ShapeDtypeStruct((rows, LANES), jnp.float32),
        grid=(rows // tr,),
        in_specs=[
            pl.BlockSpec(memory_space=pltpu.MemorySpace.SMEM),  # params (whole array)
            pl.BlockSpec((tr, LANES), lambda i: (i, 0)),        # x tile
        ],
        out_specs=pl.BlockSpec((tr, LANES), lambda i: (i, 0)),
        compiler_params=pltpu.CompilerParams(
            dimension_semantics=("parallel",)),
    )(params, x2)

    return out2.reshape(-1)[:B].reshape(B, 1)


def init_params(key):
    # Deterministic init mimicking PyTorch Linear's U(-1/sqrt(fan_in), 1/sqrt(fan_in)).
    k1, k2, k3, k4 = jax.random.split(key, 4)
    bound1 = 1.0                     # fc1: fan_in = 1
    bound2 = 1.0 / jnp.sqrt(10.0)    # fc2: fan_in = 10
    w1 = jax.random.uniform(k1, (1, 10), jnp.float32, -bound1, bound1)
    b1 = jax.random.uniform(k2, (10,), jnp.float32, -bound1, bound1)
    w2 = jax.random.uniform(k3, (10, 1), jnp.float32, -bound2, bound2)
    b2 = jax.random.uniform(k4, (1,), jnp.float32, -bound2, bound2)
    return w1, b1, w2, b2


if __name__ == "__main__":
    key = jax.random.PRNGKey(0)
    pkey, xkey = jax.random.split(key)
    w1, b1, w2, b2 = init_params(pkey)

    B = 8
    x = jax.random.normal(xkey, (B, 1), jnp.float32)

    out = simple_model_forward(x, w1, b1, w2, b2)
    jax.block_until_ready(out)

    # Pure-JAX reference check
    ref = jnp.maximum(x @ w1 + b1, 0.0) @ w2 + b2
    assert out.shape == (B, 1)
    assert jnp.allclose(out, ref, atol=1e-5, rtol=1e-5), "mismatch vs reference"

    print("KERNEL_OK")
</pallas_src>

<mosaic_0001>
module attributes {stable_mosaic.version = 11 : i64} {
  func.func @mlp_kernel(%arg0: i32, %arg1: memref<31xf32, #tpu.memory_space<smem>>, %arg2: memref<8x128xf32, #tpu.memory_space<vmem>>, %arg3: memref<8x128xf32, #tpu.memory_space<vmem>>) attributes {dimension_semantics = [#tpu.dimension_semantics<parallel>], iteration_bounds = array<i64: 1>, scalar_prefetch = 0 : i64, scratch_operands = 0 : i64, tpu.core_type = #tpu.core_type<tc>, window_params = [{transform_indices = @transform_0, window_bounds = array<i64: 31>}, {transform_indices = @transform_1, window_bounds = array<i64: 8, 128>}, {transform_indices = @transform_2, window_bounds = array<i64: 8, 128>}]} {
    %c0 = arith.constant 0 : index
    %c0_0 = arith.constant 0 : index
    %0 = vector.load %arg2[%c0, %c0_0] : memref<8x128xf32, #tpu.memory_space<vmem>>, vector<8x128xf32>
    %cst = arith.constant 0.000000e+00 : f32
    %1 = vector.broadcast %cst : f32 to vector<8x128xf32>
    %c0_1 = arith.constant 0 : index
    %2 = memref.load %arg1[%c0_1] : memref<31xf32, #tpu.memory_space<smem>>
    %3 = vector.broadcast %2 : f32 to vector<8x128xf32>
    %4 = arith.mulf %0, %3 : vector<8x128xf32>
    %c10 = arith.constant 10 : index
    %5 = memref.load %arg1[%c10] : memref<31xf32, #tpu.memory_space<smem>>
    %6 = vector.broadcast %5 : f32 to vector<8x128xf32>
    %7 = arith.addf %4, %6 : vector<8x128xf32>
    %cst_2 = arith.constant 0.000000e+00 : f32
    %8 = vector.broadcast %cst_2 : f32 to vector<8x128xf32>
    %9 = arith.maximumf %7, %8 : vector<8x128xf32>
    %c20 = arith.constant 20 : index
    %10 = memref.load %arg1[%c20] : memref<31xf32, #tpu.memory_space<smem>>
    %11 = vector.broadcast %10 : f32 to vector<8x128xf32>
    %12 = arith.mulf %9, %11 : vector<8x128xf32>
    %13 = arith.addf %1, %12 : vector<8x128xf32>
    %c1 = arith.constant 1 : index
    %14 = memref.load %arg1[%c1] : memref<31xf32, #tpu.memory_space<smem>>
    %15 = vector.broadcast %14 : f32 to vector<8x128xf32>
    %16 = arith.mulf %0, %15 : vector<8x128xf32>
    %c11 = arith.constant 11 : index
    %17 = memref.load %arg1[%c11] : memref<31xf32, #tpu.memory_space<smem>>
    %18 = vector.broadcast %17 : f32 to vector<8x128xf32>
    %19 = arith.addf %16, %18 : vector<8x128xf32>
    %cst_3 = arith.constant 0.000000e+00 : f32
    %20 = vector.broadcast %cst_3 : f32 to vector<8x128xf32>
    %21 = arith.maximumf %19, %20 : vector<8x128xf32>
    %c21 = arith.constant 21 : index
    %22 = memref.load %arg1[%c21] : memref<31xf32, #tpu.memory_space<smem>>
    %23 = vector.broadcast %22 : f32 to vector<8x128xf32>
    %24 = arith.mulf %21, %23 : vector<8x128xf32>
    %25 = arith.addf %13, %24 : vector<8x128xf32>
    %c2 = arith.constant 2 : index
    %26 = memref.load %arg1[%c2] : memref<31xf32, #tpu.memory_space<smem>>
    %27 = vector.broadcast %26 : f32 to vector<8x128xf32>
    %28 = arith.mulf %0, %27 : vector<8x128xf32>
    %c12 = arith.constant 12 : index
    %29 = memref.load %arg1[%c12] : memref<31xf32, #tpu.memory_space<smem>>
    %30 = vector.broadcast %29 : f32 to vector<8x128xf32>
    %31 = arith.addf %28, %30 : vector<8x128xf32>
    %cst_4 = arith.constant 0.000000e+00 : f32
    %32 = vector.broadcast %cst_4 : f32 to vector<8x128xf32>
    %33 = arith.maximumf %31, %32 : vector<8x128xf32>
    %c22 = arith.constant 22 : index
    %34 = memref.load %arg1[%c22] : memref<31xf32, #tpu.memory_space<smem>>
    %35 = vector.broadcast %34 : f32 to vector<8x128xf32>
    %36 = arith.mulf %33, %35 : vector<8x128xf32>
    %37 = arith.addf %25, %36 : vector<8x128xf32>
    %c3 = arith.constant 3 : index
    %38 = memref.load %arg1[%c3] : memref<31xf32, #tpu.memory_space<smem>>
    %39 = vector.broadcast %38 : f32 to vector<8x128xf32>
    %40 = arith.mulf %0, %39 : vector<8x128xf32>
    %c13 = arith.constant 13 : index
    %41 = memref.load %arg1[%c13] : memref<31xf32, #tpu.memory_space<smem>>
    %42 = vector.broadcast %41 : f32 to vector<8x128xf32>
    %43 = arith.addf %40, %42 : vector<8x128xf32>
    %cst_5 = arith.constant 0.000000e+00 : f32
    %44 = vector.broadcast %cst_5 : f32 to vector<8x128xf32>
    %45 = arith.maximumf %43, %44 : vector<8x128xf32>
    %c23 = arith.constant 23 : index
    %46 = memref.load %arg1[%c23] : memref<31xf32, #tpu.memory_space<smem>>
    %47 = vector.broadcast %46 : f32 to vector<8x128xf32>
    %48 = arith.mulf %45, %47 : vector<8x128xf32>
    %49 = arith.addf %37, %48 : vector<8x128xf32>
    %c4 = arith.constant 4 : index
    %50 = memref.load %arg1[%c4] : memref<31xf32, #tpu.memory_space<smem>>
    %51 = vector.broadcast %50 : f32 to vector<8x128xf32>
    %52 = arith.mulf %0, %51 : vector<8x128xf32>
    %c14 = arith.constant 14 : index
    %53 = memref.load %arg1[%c14] : memref<31xf32, #tpu.memory_space<smem>>
    %54 = vector.broadcast %53 : f32 to vector<8x128xf32>
    %55 = arith.addf %52, %54 : vector<8x128xf32>
    %cst_6 = arith.constant 0.000000e+00 : f32
    %56 = vector.broadcast %cst_6 : f32 to vector<8x128xf32>
    %57 = arith.maximumf %55, %56 : vector<8x128xf32>
    %c24 = arith.constant 24 : index
    %58 = memref.load %arg1[%c24] : memref<31xf32, #tpu.memory_space<smem>>
    %59 = vector.broadcast %58 : f32 to vector<8x128xf32>
    %60 = arith.mulf %57, %59 : vector<8x128xf32>
    %61 = arith.addf %49, %60 : vector<8x128xf32>
    %c5 = arith.constant 5 : index
    %62 = memref.load %arg1[%c5] : memref<31xf32, #tpu.memory_space<smem>>
    %63 = vector.broadcast %62 : f32 to vector<8x128xf32>
    %64 = arith.mulf %0, %63 : vector<8x128xf32>
    %c15 = arith.constant 15 : index
    %65 = memref.load %arg1[%c15] : memref<31xf32, #tpu.memory_space<smem>>
    %66 = vector.broadcast %65 : f32 to vector<8x128xf32>
    %67 = arith.addf %64, %66 : vector<8x128xf32>
    %cst_7 = arith.constant 0.000000e+00 : f32
    %68 = vector.broadcast %cst_7 : f32 to vector<8x128xf32>
    %69 = arith.maximumf %67, %68 : vector<8x128xf32>
    %c25 = arith.constant 25 : index
    %70 = memref.load %arg1[%c25] : memref<31xf32, #tpu.memory_space<smem>>
    %71 = vector.broadcast %70 : f32 to vector<8x128xf32>
    %72 = arith.mulf %69, %71 : vector<8x128xf32>
    %73 = arith.addf %61, %72 : vector<8x128xf32>
    %c6 = arith.constant 6 : index
    %74 = memref.load %arg1[%c6] : memref<31xf32, #tpu.memory_space<smem>>
    %75 = vector.broadcast %74 : f32 to vector<8x128xf32>
    %76 = arith.mulf %0, %75 : vector<8x128xf32>
    %c16 = arith.constant 16 : index
    %77 = memref.load %arg1[%c16] : memref<31xf32, #tpu.memory_space<smem>>
    %78 = vector.broadcast %77 : f32 to vector<8x128xf32>
    %79 = arith.addf %76, %78 : vector<8x128xf32>
    %cst_8 = arith.constant 0.000000e+00 : f32
    %80 = vector.broadcast %cst_8 : f32 to vector<8x128xf32>
    %81 = arith.maximumf %79, %80 : vector<8x128xf32>
    %c26 = arith.constant 26 : index
    %82 = memref.load %arg1[%c26] : memref<31xf32, #tpu.memory_space<smem>>
    %83 = vector.broadcast %82 : f32 to vector<8x128xf32>
    %84 = arith.mulf %81, %83 : vector<8x128xf32>
    %85 = arith.addf %73, %84 : vector<8x128xf32>
    %c7 = arith.constant 7 : index
    %86 = memref.load %arg1[%c7] : memref<31xf32, #tpu.memory_space<smem>>
    %87 = vector.broadcast %86 : f32 to vector<8x128xf32>
    %88 = arith.mulf %0, %87 : vector<8x128xf32>
    %c17 = arith.constant 17 : index
    %89 = memref.load %arg1[%c17] : memref<31xf32, #tpu.memory_space<smem>>
    %90 = vector.broadcast %89 : f32 to vector<8x128xf32>
    %91 = arith.addf %88, %90 : vector<8x128xf32>
    %cst_9 = arith.constant 0.000000e+00 : f32
    %92 = vector.broadcast %cst_9 : f32 to vector<8x128xf32>
    %93 = arith.maximumf %91, %92 : vector<8x128xf32>
    %c27 = arith.constant 27 : index
    %94 = memref.load %arg1[%c27] : memref<31xf32, #tpu.memory_space<smem>>
    %95 = vector.broadcast %94 : f32 to vector<8x128xf32>
    %96 = arith.mulf %93, %95 : vector<8x128xf32>
    %97 = arith.addf %85, %96 : vector<8x128xf32>
    %c8 = arith.constant 8 : index
    %98 = memref.load %arg1[%c8] : memref<31xf32, #tpu.memory_space<smem>>
    %99 = vector.broadcast %98 : f32 to vector<8x128xf32>
    %100 = arith.mulf %0, %99 : vector<8x128xf32>
    %c18 = arith.constant 18 : index
    %101 = memref.load %arg1[%c18] : memref<31xf32, #tpu.memory_space<smem>>
    %102 = vector.broadcast %101 : f32 to vector<8x128xf32>
    %103 = arith.addf %100, %102 : vector<8x128xf32>
    %cst_10 = arith.constant 0.000000e+00 : f32
    %104 = vector.broadcast %cst_10 : f32 to vector<8x128xf32>
    %105 = arith.maximumf %103, %104 : vector<8x128xf32>
    %c28 = arith.constant 28 : index
    %106 = memref.load %arg1[%c28] : memref<31xf32, #tpu.memory_space<smem>>
    %107 = vector.broadcast %106 : f32 to vector<8x128xf32>
    %108 = arith.mulf %105, %107 : vector<8x128xf32>
    %109 = arith.addf %97, %108 : vector<8x128xf32>
    %c9 = arith.constant 9 : index
    %110 = memref.load %arg1[%c9] : memref<31xf32, #tpu.memory_space<smem>>
    %111 = vector.broadcast %110 : f32 to vector<8x128xf32>
    %112 = arith.mulf %0, %111 : vector<8x128xf32>
    %c19 = arith.constant 19 : index
    %113 = memref.load %arg1[%c19] : memref<31xf32, #tpu.memory_space<smem>>
    %114 = vector.broadcast %113 : f32 to vector<8x128xf32>
    %115 = arith.addf %112, %114 : vector<8x128xf32>
    %cst_11 = arith.constant 0.000000e+00 : f32
    %116 = vector.broadcast %cst_11 : f32 to vector<8x128xf32>
    %117 = arith.maximumf %115, %116 : vector<8x128xf32>
    %c29 = arith.constant 29 : index
    %118 = memref.load %arg1[%c29] : memref<31xf32, #tpu.memory_space<smem>>
    %119 = vector.broadcast %118 : f32 to vector<8x128xf32>
    %120 = arith.mulf %117, %119 : vector<8x128xf32>
    %121 = arith.addf %109, %120 : vector<8x128xf32>
    %c30 = arith.constant 30 : index
    %122 = memref.load %arg1[%c30] : memref<31xf32, #tpu.memory_space<smem>>
    %123 = vector.broadcast %122 : f32 to vector<8x128xf32>
    %124 = arith.addf %121, %123 : vector<8x128xf32>
    %c0_12 = arith.constant 0 : index
    %c0_13 = arith.constant 0 : index
    %125 = vector.load %arg3[%c0_12, %c0_13] : memref<8x128xf32, #tpu.memory_space<vmem>>, vector<8x128xf32>
    tpu.vector_store %arg3[%c0_12, %c0_13], %124 {strides = array<i32>} : memref<8x128xf32, #tpu.memory_space<vmem>>, vector<8x128xf32>,
    return
  }
  func.func @transform_0(%arg0: i32) -> i32 {
    %c0_i32 = arith.constant 0 : i32
    %c0_i32_0 = arith.constant 0 : i32
    return %c0_i32 : i32
  }
  func.func @transform_1(%arg0: i32) -> (i32, i32) {
    %c0_i32 = arith.constant 0 : i32
    %c0_i32_0 = arith.constant 0 : i32
    return %arg0, %c0_i32 : i32, i32
  }
  func.func @transform_2(%arg0: i32) -> (i32, i32) {
    %c0_i32 = arith.constant 0 : i32
    %c0_i32_0 = arith.constant 0 : i32
    return %arg0, %c0_i32 : i32, i32
  }
}

</mosaic_0001>

<llo_original>
// kernel: tpu_custom_call.1
$region0: #{tpu_custom_call.1}
  #allocation0 [shape = 'u32[]', space=smem, size = 0x4, offset = 0x4, fixed_abs, tag = 'smem constant byte address 0x4 - core index']
  #allocation1 [shape = 'u32[144,128]{1,0:T(1,128)}', space=vmem, size = 0x12000, scoped, tag = 'internal scratch']
  %s0 = inlined_call_operand.hbm [shape: f32[31], index: 0, kind: input, shape index: {}]
  %s1 = inlined_call_operand.hbm [shape: f32[8,128], index: 1, kind: input, shape index: {}]
  %s2 = inlined_call_operand.hbm [shape: f32[8,128], index: 2, kind: output, shape index: {}]
  %s3 = sld [smem:[#allocation0]]
  $region26: #{tpu_custom_call.1} parent=0
    _
  %s5 = ssub.s32 1, %s3
  %s6 = scalar_select 0, %s5, %s3
  $region1: #{tpu_custom_call.1} parent=0
    #allocation2 [shape = 'u8[512]{0}', space=smem, size = 0x200, scoped, tag = 'input window, operand 0, single buffered']
    #allocation3 [shape = 's32[1]{0}', space=sflag, size = 0x4, scoped, tag = 'scoped memory for tpu_custom_call.1']
    #allocation4 [shape = 's32[1]{0}', space=sflag, size = 0x4, scoped, tag = 'scoped memory for tpu_custom_call.1']
    #allocation5 [shape = 's32[1]{0}', space=sflag, size = 0x4, scoped, tag = 'scoped memory for tpu_custom_call.1']
    #allocation6 [shape = 'u8[4096]{0}', space=vmem, size = 0x1000, scoped, tag = 'input window, operand 1, single buffered']
    #allocation7 [shape = 'u8[4096]{0}', space=vmem, size = 0x1000, scoped, tag = 'output window, operand 0, single buffered']
    %7 = vsyncpa [#allocation5], 0
    %8 = vsyncpa [#allocation3], 0
    %9 = vsyncpa [#allocation4], 0
    // Predicated region
    $region2: #{tpu_custom_call.1} parent=1 // pred_check
      _
    $region3: #{tpu_custom_call.1} parent=1 // pred_check_branch
      %11 = sbr.rel (0) target = $region5
    $region4: #{tpu_custom_call.1} parent=1 // pred_region
      %s13 = ssub.s32 16, 16
      %14 = vsyncadd [#allocation5], %s13
      %17 = dma.hbm_to_smem %s0, 16, [#allocation2], [#allocation5]
    $region5: #{tpu_custom_call.1} parent=1 // pred_fallthru
      _
    // Predicated region
    $region6: #{tpu_custom_call.1} parent=1 // pred_check
      _
    $region7: #{tpu_custom_call.1} parent=1 // pred_check_branch
      %19 = sbr.rel (0) target = $region9
    $region8: #{tpu_custom_call.1} parent=1 // pred_region
      %s21 = ssub.s32 128, 128
      %22 = vsyncadd [#allocation3], %s21
      %s24 = sshll.u32 [#allocation6], 4
      %s25 = int_to_ptr.vmem [resolvable:$true] %s24
      %27 = dma.hbm_to_vmem [thread:$0]  %s1, 128, %s25, [#allocation3]
    $region9: #{tpu_custom_call.1} parent=1 // pred_fallthru
      _
    // Predicated region
    $region10: #{tpu_custom_call.1} parent=1 // pred_check
      _
    $region11: #{tpu_custom_call.1} parent=1 // pred_check_branch
      %29 = sbr.rel (0) target = $region13
    $region12: #{tpu_custom_call.1} parent=1 // pred_region
      %30 = dma.done [#allocation5], 16
    $region13: #{tpu_custom_call.1} parent=1 // pred_fallthru
      _
    // Predicated region
    $region14: #{tpu_custom_call.1} parent=1 // pred_check
      _
    $region15: #{tpu_custom_call.1} parent=1 // pred_check_branch
      %32 = sbr.rel (0) target = $region17
    $region16: #{tpu_custom_call.1} parent=1 // pred_region
      %33 = dma.done [#allocation3], 128
    $region17: #{tpu_custom_call.1} parent=1 // pred_fallthru
      _
    %34 = sfence
    %v35 = vld [vmem:[#allocation6] sm:$0xff]
    %s36 = sld [smem:[#allocation2]]
    %v37 = vstv %s36
    %v38 = vmul.f32 %v35, %v37
    %s39 = sld [smem:[#allocation2 + $0xa]]
    %v40 = vstv %s39
    %v41 = vadd.f32 %v38, %v40
    %v42 = vmax.f32 %v41, 0.0
    %s43 = sld [smem:[#allocation2 + $0x14]]
    %v44 = vstv %s43
    %v45 = vmul.f32 %v42, %v44
    %v46 = vadd.f32 %v45, 0.0
    %s47 = sld [smem:[#allocation2 + $0x1]]
    %v48 = vstv %s47
    %v49 = vmul.f32 %v35, %v48
    %s50 = sld [smem:[#allocation2 + $0xb]]
    %v51 = vstv %s50
    %v52 = vadd.f32 %v49, %v51
    %v53 = vmax.f32 %v52, 0.0
    %s54 = sld [smem:[#allocation2 + $0x15]]
    %v55 = vstv %s54
    %v56 = vmul.f32 %v53, %v55
    %v57 = vadd.f32 %v46, %v56
    %s58 = sld [smem:[#allocation2 + $0x2]]
    %v59 = vstv %s58
    %v60 = vmul.f32 %v35, %v59
    %s61 = sld [smem:[#allocation2 + $0xc]]
    %v62 = vstv %s61
    %v63 = vadd.f32 %v60, %v62
    %v64 = vmax.f32 %v63, 0.0
    %s65 = sld [smem:[#allocation2 + $0x16]]
    %v66 = vstv %s65
    %v67 = vmul.f32 %v64, %v66
    %v68 = vadd.f32 %v57, %v67
    %s69 = sld [smem:[#allocation2 + $0x3]]
    %v70 = vstv %s69
    %v71 = vmul.f32 %v35, %v70
    %s72 = sld [smem:[#allocation2 + $0xd]]
    %v73 = vstv %s72
    %v74 = vadd.f32 %v71, %v73
    %v75 = vmax.f32 %v74, 0.0
    %s76 = sld [smem:[#allocation2 + $0x17]]
    %v77 = vstv %s76
    %v78 = vmul.f32 %v75, %v77
    %v79 = vadd.f32 %v68, %v78
    %s80 = sld [smem:[#allocation2 + $0x4]]
    %v81 = vstv %s80
    %v82 = vmul.f32 %v35, %v81
    %s83 = sld [smem:[#allocation2 + $0xe]]
    %v84 = vstv %s83
    %v85 = vadd.f32 %v82, %v84
    %v86 = vmax.f32 %v85, 0.0
    %s87 = sld [smem:[#allocation2 + $0x18]]
    %v88 = vstv %s87
    %v89 = vmul.f32 %v86, %v88
    %v90 = vadd.f32 %v79, %v89
    %s91 = sld [smem:[#allocation2 + $0x5]]
    %v92 = vstv %s91
    %v93 = vmul.f32 %v35, %v92
    %s94 = sld [smem:[#allocation2 + $0xf]]
    %v95 = vstv %s94
    %v96 = vadd.f32 %v93, %v95
    %v97 = vmax.f32 %v96, 0.0
    %s98 = sld [smem:[#allocation2 + $0x19]]
    %v99 = vstv %s98
    %v100 = vmul.f32 %v97, %v99
    %v101 = vadd.f32 %v90, %v100
    %s102 = sld [smem:[#allocation2 + $0x6]]
    %v103 = vstv %s102
    %v104 = vmul.f32 %v35, %v103
    %s105 = sld [smem:[#allocation2 + $0x10]]
    %v106 = vstv %s105
    %v107 = vadd.f32 %v104, %v106
    %v108 = vmax.f32 %v107, 0.0
    %s109 = sld [smem:[#allocation2 + $0x1a]]
    %v110 = vstv %s109
    %v111 = vmul.f32 %v108, %v110
    %v112 = vadd.f32 %v101, %v111
    %s113 = sld [smem:[#allocation2 + $0x7]]
    %v114 = vstv %s113
    %v115 = vmul.f32 %v35, %v114
    %s116 = sld [smem:[#allocation2 + $0x11]]
    %v117 = vstv %s116
    %v118 = vadd.f32 %v115, %v117
    %v119 = vmax.f32 %v118, 0.0
    %s120 = sld [smem:[#allocation2 + $0x1b]]
    %v121 = vstv %s120
    %v122 = vmul.f32 %v119, %v121
    %v123 = vadd.f32 %v112, %v122
    %s124 = sld [smem:[#allocation2 + $0x8]]
    %v125 = vstv %s124
    %v126 = vmul.f32 %v35, %v125
    %s127 = sld [smem:[#allocation2 + $0x12]]
    %v128 = vstv %s127
    %v129 = vadd.f32 %v126, %v128
    %v130 = vmax.f32 %v129, 0.0
    %s131 = sld [smem:[#allocation2 + $0x1c]]
    %v132 = vstv %s131
    %v133 = vmul.f32 %v130, %v132
    %v134 = vadd.f32 %v123, %v133
    %s135 = sld [smem:[#allocation2 + $0x9]]
    %v136 = vstv %s135
    %v137 = vmul.f32 %v35, %v136
    %s138 = sld [smem:[#allocation2 + $0x13]]
    %v139 = vstv %s138
    %v140 = vadd.f32 %v137, %v139
    %v141 = vmax.f32 %v140, 0.0
    %s142 = sld [smem:[#allocation2 + $0x1d]]
    %v143 = vstv %s142
    %v144 = vmul.f32 %v141, %v143
    %v145 = vadd.f32 %v134, %v144
    %s146 = sld [smem:[#allocation2 + $0x1e]]
    %v147 = vstv %s146
    %v148 = vadd.f32 %v145, %v147
    %149 = vst [vmem:[#allocation7] sm:$0xff] %v148
    // Predicated region
    $region18: #{tpu_custom_call.1} parent=1 // pred_check
      _
    $region19: #{tpu_custom_call.1} parent=1 // pred_check_branch
      %151 = sbr.rel (0) target = $region21
    $region20: #{tpu_custom_call.1} parent=1 // pred_region
      %s153 = ssub.s32 128, 128
      %154 = vsyncadd [#allocation4], %s153
      %s156 = sshll.u32 [#allocation7], 4
      %s157 = int_to_ptr.vmem [resolvable:$true] %s156
      %159 = dma.vmem_to_hbm [thread:$0]  %s157, 128, %s2, [#allocation4]
    $region21: #{tpu_custom_call.1} parent=1 // pred_fallthru
      _
    // Predicated region
    $region22: #{tpu_custom_call.1} parent=1 // pred_check
      _
    $region23: #{tpu_custom_call.1} parent=1 // pred_check_branch
      %161 = sbr.rel (0) target = $region25
    $region24: #{tpu_custom_call.1} parent=1 // pred_region
      %162 = dma.done [#allocation4], 128
    $region25: #{tpu_custom_call.1} parent=1 // pred_fallthru
      _
    %163 = vsyncpa [#allocation3], 1
    %164 = vsyncpa [#allocation4], 1
    %165 = vsyncpa [#allocation5], 1

</llo_original>
